<compile_context>
chip_gen: v6e
topology: v6e:2x2x1
jax: 0.10.0
libtpu: 0.0.40
codegen_flags: <defaults>
</compile_context>

<pallas_src>
import functools

import jax
import jax.numpy as jnp
from jax import lax
from jax.experimental import pallas as pl
from jax.experimental.pallas import tpu as pltpu

HIDDEN = 10
LANE = 128
STRIP_ROWS = 128        # 128x128 f32 strip = 16 vregs per live value
MAX_TILE_ROWS = 2048    # 2048x128 f32 block = 1 MiB per buffer (fits default scoped VMEM everywhere)


def _cdiv(a, b):
    return -(-a // b)


def _round_up(a, b):
    return _cdiv(a, b) * b


def residual_net_kernel(x_ref, w1_ref, b1_ref, w2_ref, b2_ref, o_ref, *, bf16_tanh=False):
    # x_ref / o_ref: [tile_rows, 128] f32 VMEM blocks (lane-dense batch)
    # w1_ref/b1_ref/w2_ref: [10] f32 SMEM   b2_ref: [1] f32 SMEM
    tile_rows = x_ref.shape[0]

    # Read the 31 parameters out of SMEM once; reused across all strips.
    w1 = [w1_ref[j] for j in range(HIDDEN)]
    b1 = [b1_ref[j] for j in range(HIDDEN)]
    w2 = [w2_ref[j] for j in range(HIDDEN)]
    b2 = b2_ref[0]

    def compute(x):
        # Pure VPU/EUP elementwise chain; acc starts from the j=0 term, b2 added once.
        def unit(j, xv):
            pre = w1[j] * xv + b1[j]
            if bf16_tanh:
                # Packed bf16 tanh doubles EUP throughput on v6e/v7x (~1e-3 rel err).
                t = jnp.tanh(pre.astype(jnp.bfloat16)).astype(jnp.float32)
            else:
                t = jnp.tanh(pre)
            return w2[j] * t

        acc = unit(0, x)
        for j in range(1, HIDDEN):  # unrolled at trace time
            acc = acc + unit(j, x)
        return acc + b2

    n_full = tile_rows // STRIP_ROWS
    rem = tile_rows % STRIP_ROWS

    if n_full > 0:
        def strip_body(s, carry):
            r0 = pl.multiple_of(s * STRIP_ROWS, STRIP_ROWS)
            x = x_ref[pl.ds(r0, STRIP_ROWS), :]
            o_ref[pl.ds(r0, STRIP_ROWS), :] = compute(x).astype(o_ref.dtype)
            return carry

        lax.fori_loop(0, n_full, strip_body, 0)

    if rem > 0:
        r0 = n_full * STRIP_ROWS  # static
        x = x_ref[pl.ds(r0, rem), :]
        o_ref[pl.ds(r0, rem), :] = compute(x).astype(o_ref.dtype)


def residual_net_forward(x, w1, b1, w2, b2, *, max_tile_rows=MAX_TILE_ROWS, bf16_tanh=False):
    """x: [N, 1] f32.

    Weights are expected pre-transposed to [in, out] layout (w1: [1, 10], w2: [10, 1]),
    i.e. the transpose of PyTorch nn.Linear's [out, in] weight. (With unit dims the
    flatten makes the distinction moot numerically, but the contract is explicit.)
    b1: [10], b2: [1].
    """
    n = x.shape[0]
    x_flat = x.reshape(-1).astype(jnp.float32)  # in_features == 1, so just [N]

    # Lane-dense layout: [N] -> [rows, 128]; pad ONLY to the 128-lane boundary.
    if n % LANE == 0:
        rows = n // LANE
        x2d = x_flat.reshape(rows, LANE)  # free reshape, no pad / no slice afterwards
    else:
        rows = _cdiv(n, LANE)
        x2d = jnp.pad(x_flat, (0, rows * LANE - n)).reshape(rows, LANE)
        # TODO(synk): for huge ragged N, handle the <128-sample tail in a tiny second
        # call instead of padding/slicing the whole flat array.

    # Tiling: big blocks, but at least 2 (even) tiles for mid/large batches so both
    # v7x TensorCores get work. Last grid block may be partial; Pallas clips it.
    if rows <= 16:
        tile_rows, num_tiles = rows, 1
    else:
        num_tiles = max(2, _cdiv(rows, max_tile_rows))
        num_tiles += num_tiles % 2                       # even tile count for 2 TCs
        tile_rows = _round_up(_cdiv(rows, num_tiles), 8)  # (8,128)-aligned block
        num_tiles = _cdiv(rows, tile_rows)                # actual grid extent

    # Parameters as tiny 1-D SMEM arrays.
    w1_s = w1.reshape(-1).astype(jnp.float32)   # [10]
    b1_s = b1.reshape(-1).astype(jnp.float32)   # [10]
    w2_s = w2.reshape(-1).astype(jnp.float32)   # [10]
    b2_s = b2.reshape(-1).astype(jnp.float32)   # [1]

    n_elems = rows * LANE
    kernel = functools.partial(residual_net_kernel, bf16_tanh=bf16_tanh)

    out2d = pl.pallas_call(
        kernel,
        out_shape=jax.ShapeDtypeStruct((rows, LANE), jnp.float32),
        grid=(num_tiles,),
        in_specs=[
            pl.BlockSpec((tile_rows, LANE), lambda i: (i, 0)),
            pl.BlockSpec(memory_space=pltpu.MemorySpace.SMEM),
            pl.BlockSpec(memory_space=pltpu.MemorySpace.SMEM),
            pl.BlockSpec(memory_space=pltpu.MemorySpace.SMEM),
            pl.BlockSpec(memory_space=pltpu.MemorySpace.SMEM),
        ],
        out_specs=pl.BlockSpec((tile_rows, LANE), lambda i: (i, 0)),
        compiler_params=pltpu.CompilerParams(
            dimension_semantics=("parallel",),
        ),
        cost_estimate=pl.CostEstimate(
            flops=41 * n_elems,            # 10 * (mul+add+mul+add) + final bias add
            transcendentals=10 * n_elems,  # 10 tanh per sample
            bytes_accessed=8 * n_elems,    # 4B read + 4B write per sample
        ),
    )(x2d, w1_s, b1_s, w2_s, b2_s)

    if n % LANE == 0:
        return out2d.reshape(n, 1)
    return out2d.reshape(-1)[:n].reshape(n, 1)


def init_params(key):
    # Mimics nn.Linear's uniform(-1/sqrt(fan_in), 1/sqrt(fan_in)) init; weights in [in, out].
    k1, k2, k3, k4 = jax.random.split(key, 4)
    bound1 = 1.0  # fan_in = 1
    w1 = jax.random.uniform(k1, (1, HIDDEN), jnp.float32, -bound1, bound1)
    b1 = jax.random.uniform(k2, (HIDDEN,), jnp.float32, -bound1, bound1)
    bound2 = 1.0 / jnp.sqrt(float(HIDDEN))  # fan_in = 10
    w2 = jax.random.uniform(k3, (HIDDEN, 1), jnp.float32, -bound2, bound2)
    b2 = jax.random.uniform(k4, (1,), jnp.float32, -bound2, bound2)
    return w1, b1, w2, b2


def reference_forward(x, w1, b1, w2, b2):
    h = jnp.tanh(x @ w1 + b1)
    return h @ w2 + b2


if __name__ == "__main__":
    key = jax.random.PRNGKey(0)
    kx, kp, kx2 = jax.random.split(key, 3)
    w1, b1, w2, b2 = init_params(kp)

    # Small case (matches the module's toy usage): single full-array block.
    batch = 8
    x = jax.random.normal(kx, (batch, 1), jnp.float32)
    out = jax.block_until_ready(residual_net_forward(x, w1, b1, w2, b2))
    ref = reference_forward(x, w1, b1, w2, b2)
    assert out.shape == (batch, 1)
    assert jnp.allclose(out, ref, atol=1e-5, rtol=1e-5)

    # Medium ragged case: exercises multi-tile grid, partial last block, strip loop + tail.
    batch2 = 300 * LANE + 37
    x2 = jax.random.normal(kx2, (batch2, 1), jnp.float32)
    out2 = jax.block_until_ready(residual_net_forward(x2, w1, b1, w2, b2))
    ref2 = reference_forward(x2, w1, b1, w2, b2)
    assert out2.shape == (batch2, 1)
    assert jnp.allclose(out2, ref2, atol=1e-5, rtol=1e-5)

    print("KERNEL_OK")
</pallas_src>

<mosaic_0001>
module attributes {stable_mosaic.version = 11 : i64} {
  func.func @residual_net_kernel(%arg0: i32, %arg1: memref<1x128xf32, #tpu.memory_space<vmem>>, %arg2: memref<10xf32, #tpu.memory_space<smem>>, %arg3: memref<10xf32, #tpu.memory_space<smem>>, %arg4: memref<10xf32, #tpu.memory_space<smem>>, %arg5: memref<1xf32, #tpu.memory_space<smem>>, %arg6: memref<1x128xf32, #tpu.memory_space<vmem>>) attributes {dimension_semantics = [#tpu.dimension_semantics<parallel>], iteration_bounds = array<i64: 1>, scalar_prefetch = 0 : i64, scratch_operands = 0 : i64, tpu.core_type = #tpu.core_type<tc>, window_params = [{transform_indices = @transform_0, window_bounds = array<i64: 1, 128>}, {transform_indices = @transform_1, window_bounds = array<i64: 10>}, {transform_indices = @transform_2, window_bounds = array<i64: 10>}, {transform_indices = @transform_3, window_bounds = array<i64: 10>}, {transform_indices = @transform_4, window_bounds = array<i64: 1>}, {transform_indices = @transform_5, window_bounds = array<i64: 1, 128>}]} {
    %c0 = arith.constant 0 : index
    %0 = memref.load %arg2[%c0] : memref<10xf32, #tpu.memory_space<smem>>
    %c1 = arith.constant 1 : index
    %1 = memref.load %arg2[%c1] : memref<10xf32, #tpu.memory_space<smem>>
    %c2 = arith.constant 2 : index
    %2 = memref.load %arg2[%c2] : memref<10xf32, #tpu.memory_space<smem>>
    %c3 = arith.constant 3 : index
    %3 = memref.load %arg2[%c3] : memref<10xf32, #tpu.memory_space<smem>>
    %c4 = arith.constant 4 : index
    %4 = memref.load %arg2[%c4] : memref<10xf32, #tpu.memory_space<smem>>
    %c5 = arith.constant 5 : index
    %5 = memref.load %arg2[%c5] : memref<10xf32, #tpu.memory_space<smem>>
    %c6 = arith.constant 6 : index
    %6 = memref.load %arg2[%c6] : memref<10xf32, #tpu.memory_space<smem>>
    %c7 = arith.constant 7 : index
    %7 = memref.load %arg2[%c7] : memref<10xf32, #tpu.memory_space<smem>>
    %c8 = arith.constant 8 : index
    %8 = memref.load %arg2[%c8] : memref<10xf32, #tpu.memory_space<smem>>
    %c9 = arith.constant 9 : index
    %9 = memref.load %arg2[%c9] : memref<10xf32, #tpu.memory_space<smem>>
    %c0_0 = arith.constant 0 : index
    %10 = memref.load %arg3[%c0_0] : memref<10xf32, #tpu.memory_space<smem>>
    %c1_1 = arith.constant 1 : index
    %11 = memref.load %arg3[%c1_1] : memref<10xf32, #tpu.memory_space<smem>>
    %c2_2 = arith.constant 2 : index
    %12 = memref.load %arg3[%c2_2] : memref<10xf32, #tpu.memory_space<smem>>
    %c3_3 = arith.constant 3 : index
    %13 = memref.load %arg3[%c3_3] : memref<10xf32, #tpu.memory_space<smem>>
    %c4_4 = arith.constant 4 : index
    %14 = memref.load %arg3[%c4_4] : memref<10xf32, #tpu.memory_space<smem>>
    %c5_5 = arith.constant 5 : index
    %15 = memref.load %arg3[%c5_5] : memref<10xf32, #tpu.memory_space<smem>>
    %c6_6 = arith.constant 6 : index
    %16 = memref.load %arg3[%c6_6] : memref<10xf32, #tpu.memory_space<smem>>
    %c7_7 = arith.constant 7 : index
    %17 = memref.load %arg3[%c7_7] : memref<10xf32, #tpu.memory_space<smem>>
    %c8_8 = arith.constant 8 : index
    %18 = memref.load %arg3[%c8_8] : memref<10xf32, #tpu.memory_space<smem>>
    %c9_9 = arith.constant 9 : index
    %19 = memref.load %arg3[%c9_9] : memref<10xf32, #tpu.memory_space<smem>>
    %c0_10 = arith.constant 0 : index
    %20 = memref.load %arg4[%c0_10] : memref<10xf32, #tpu.memory_space<smem>>
    %c1_11 = arith.constant 1 : index
    %21 = memref.load %arg4[%c1_11] : memref<10xf32, #tpu.memory_space<smem>>
    %c2_12 = arith.constant 2 : index
    %22 = memref.load %arg4[%c2_12] : memref<10xf32, #tpu.memory_space<smem>>
    %c3_13 = arith.constant 3 : index
    %23 = memref.load %arg4[%c3_13] : memref<10xf32, #tpu.memory_space<smem>>
    %c4_14 = arith.constant 4 : index
    %24 = memref.load %arg4[%c4_14] : memref<10xf32, #tpu.memory_space<smem>>
    %c5_15 = arith.constant 5 : index
    %25 = memref.load %arg4[%c5_15] : memref<10xf32, #tpu.memory_space<smem>>
    %c6_16 = arith.constant 6 : index
    %26 = memref.load %arg4[%c6_16] : memref<10xf32, #tpu.memory_space<smem>>
    %c7_17 = arith.constant 7 : index
    %27 = memref.load %arg4[%c7_17] : memref<10xf32, #tpu.memory_space<smem>>
    %c8_18 = arith.constant 8 : index
    %28 = memref.load %arg4[%c8_18] : memref<10xf32, #tpu.memory_space<smem>>
    %c9_19 = arith.constant 9 : index
    %29 = memref.load %arg4[%c9_19] : memref<10xf32, #tpu.memory_space<smem>>
    %c0_20 = arith.constant 0 : index
    %30 = memref.load %arg5[%c0_20] : memref<1xf32, #tpu.memory_space<smem>>
    %c0_21 = arith.constant 0 : index
    %c0_22 = arith.constant 0 : index
    %31 = vector.load %arg1[%c0_21, %c0_22] : memref<1x128xf32, #tpu.memory_space<vmem>>, vector<1x128xf32>
    %32 = vector.broadcast %0 : f32 to vector<1x128xf32>
    %33 = arith.mulf %32, %31 : vector<1x128xf32>
    %34 = vector.broadcast %10 : f32 to vector<1x128xf32>
    %35 = arith.addf %33, %34 : vector<1x128xf32>
    %36 = math.tanh %35 : vector<1x128xf32>
    %37 = vector.broadcast %20 : f32 to vector<1x128xf32>
    %38 = arith.mulf %37, %36 : vector<1x128xf32>
    %39 = vector.broadcast %1 : f32 to vector<1x128xf32>
    %40 = arith.mulf %39, %31 : vector<1x128xf32>
    %41 = vector.broadcast %11 : f32 to vector<1x128xf32>
    %42 = arith.addf %40, %41 : vector<1x128xf32>
    %43 = math.tanh %42 : vector<1x128xf32>
    %44 = vector.broadcast %21 : f32 to vector<1x128xf32>
    %45 = arith.mulf %44, %43 : vector<1x128xf32>
    %46 = arith.addf %38, %45 : vector<1x128xf32>
    %47 = vector.broadcast %2 : f32 to vector<1x128xf32>
    %48 = arith.mulf %47, %31 : vector<1x128xf32>
    %49 = vector.broadcast %12 : f32 to vector<1x128xf32>
    %50 = arith.addf %48, %49 : vector<1x128xf32>
    %51 = math.tanh %50 : vector<1x128xf32>
    %52 = vector.broadcast %22 : f32 to vector<1x128xf32>
    %53 = arith.mulf %52, %51 : vector<1x128xf32>
    %54 = arith.addf %46, %53 : vector<1x128xf32>
    %55 = vector.broadcast %3 : f32 to vector<1x128xf32>
    %56 = arith.mulf %55, %31 : vector<1x128xf32>
    %57 = vector.broadcast %13 : f32 to vector<1x128xf32>
    %58 = arith.addf %56, %57 : vector<1x128xf32>
    %59 = math.tanh %58 : vector<1x128xf32>
    %60 = vector.broadcast %23 : f32 to vector<1x128xf32>
    %61 = arith.mulf %60, %59 : vector<1x128xf32>
    %62 = arith.addf %54, %61 : vector<1x128xf32>
    %63 = vector.broadcast %4 : f32 to vector<1x128xf32>
    %64 = arith.mulf %63, %31 : vector<1x128xf32>
    %65 = vector.broadcast %14 : f32 to vector<1x128xf32>
    %66 = arith.addf %64, %65 : vector<1x128xf32>
    %67 = math.tanh %66 : vector<1x128xf32>
    %68 = vector.broadcast %24 : f32 to vector<1x128xf32>
    %69 = arith.mulf %68, %67 : vector<1x128xf32>
    %70 = arith.addf %62, %69 : vector<1x128xf32>
    %71 = vector.broadcast %5 : f32 to vector<1x128xf32>
    %72 = arith.mulf %71, %31 : vector<1x128xf32>
    %73 = vector.broadcast %15 : f32 to vector<1x128xf32>
    %74 = arith.addf %72, %73 : vector<1x128xf32>
    %75 = math.tanh %74 : vector<1x128xf32>
    %76 = vector.broadcast %25 : f32 to vector<1x128xf32>
    %77 = arith.mulf %76, %75 : vector<1x128xf32>
    %78 = arith.addf %70, %77 : vector<1x128xf32>
    %79 = vector.broadcast %6 : f32 to vector<1x128xf32>
    %80 = arith.mulf %79, %31 : vector<1x128xf32>
    %81 = vector.broadcast %16 : f32 to vector<1x128xf32>
    %82 = arith.addf %80, %81 : vector<1x128xf32>
    %83 = math.tanh %82 : vector<1x128xf32>
    %84 = vector.broadcast %26 : f32 to vector<1x128xf32>
    %85 = arith.mulf %84, %83 : vector<1x128xf32>
    %86 = arith.addf %78, %85 : vector<1x128xf32>
    %87 = vector.broadcast %7 : f32 to vector<1x128xf32>
    %88 = arith.mulf %87, %31 : vector<1x128xf32>
    %89 = vector.broadcast %17 : f32 to vector<1x128xf32>
    %90 = arith.addf %88, %89 : vector<1x128xf32>
    %91 = math.tanh %90 : vector<1x128xf32>
    %92 = vector.broadcast %27 : f32 to vector<1x128xf32>
    %93 = arith.mulf %92, %91 : vector<1x128xf32>
    %94 = arith.addf %86, %93 : vector<1x128xf32>
    %95 = vector.broadcast %8 : f32 to vector<1x128xf32>
    %96 = arith.mulf %95, %31 : vector<1x128xf32>
    %97 = vector.broadcast %18 : f32 to vector<1x128xf32>
    %98 = arith.addf %96, %97 : vector<1x128xf32>
    %99 = math.tanh %98 : vector<1x128xf32>
    %100 = vector.broadcast %28 : f32 to vector<1x128xf32>
    %101 = arith.mulf %100, %99 : vector<1x128xf32>
    %102 = arith.addf %94, %101 : vector<1x128xf32>
    %103 = vector.broadcast %9 : f32 to vector<1x128xf32>
    %104 = arith.mulf %103, %31 : vector<1x128xf32>
    %105 = vector.broadcast %19 : f32 to vector<1x128xf32>
    %106 = arith.addf %104, %105 : vector<1x128xf32>
    %107 = math.tanh %106 : vector<1x128xf32>
    %108 = vector.broadcast %29 : f32 to vector<1x128xf32>
    %109 = arith.mulf %108, %107 : vector<1x128xf32>
    %110 = arith.addf %102, %109 : vector<1x128xf32>
    %111 = vector.broadcast %30 : f32 to vector<1x128xf32>
    %112 = arith.addf %110, %111 : vector<1x128xf32>
    %c0_23 = arith.constant 0 : index
    %c0_24 = arith.constant 0 : index
    %113 = vector.load %arg6[%c0_23, %c0_24] : memref<1x128xf32, #tpu.memory_space<vmem>>, vector<1x128xf32>
    tpu.vector_store %arg6[%c0_23, %c0_24], %112 {strides = array<i32>} : memref<1x128xf32, #tpu.memory_space<vmem>>, vector<1x128xf32>,
    return
  }
  func.func @transform_0(%arg0: i32) -> (i32, i32) {
    %c0_i32 = arith.constant 0 : i32
    %c0_i32_0 = arith.constant 0 : i32
    return %arg0, %c0_i32 : i32, i32
  }
  func.func @transform_1(%arg0: i32) -> i32 {
    %c0_i32 = arith.constant 0 : i32
    %c0_i32_0 = arith.constant 0 : i32
    return %c0_i32 : i32
  }
  func.func @transform_2(%arg0: i32) -> i32 {
    %c0_i32 = arith.constant 0 : i32
    %c0_i32_0 = arith.constant 0 : i32
    return %c0_i32 : i32
  }
  func.func @transform_3(%arg0: i32) -> i32 {
    %c0_i32 = arith.constant 0 : i32
    %c0_i32_0 = arith.constant 0 : i32
    return %c0_i32 : i32
  }
  func.func @transform_4(%arg0: i32) -> i32 {
    %c0_i32 = arith.constant 0 : i32
    %c0_i32_0 = arith.constant 0 : i32
    return %c0_i32 : i32
  }
  func.func @transform_5(%arg0: i32) -> (i32, i32) {
    %c0_i32 = arith.constant 0 : i32
    %c0_i32_0 = arith.constant 0 : i32
    return %arg0, %c0_i32 : i32, i32
  }
}

</mosaic_0001>

<llo_original>
// kernel: tpu_custom_call.1
$region0: #{tpu_custom_call.1}
  #allocation0 [shape = 'u32[]', space=smem, size = 0x4, offset = 0x4, fixed_abs, tag = 'smem constant byte address 0x4 - core index']
  #allocation1 [shape = 'u32[144,128]{1,0:T(1,128)}', space=vmem, size = 0x12000, scoped, tag = 'internal scratch']
  #allocation2 [shape = 'f32[1]{0:T(128)S(6)}', space=smem, size = 0x200, scoped, tag = 'scoped memory for tpu_custom_call.1']
  %s0 = inlined_call_operand.vmem [shape: f32[1,128], index: 0, kind: input, shape index: {}]
  %s1 = inlined_call_operand.vmem [shape: f32[10], index: 1, kind: input, shape index: {}]
  %s2 = inlined_call_operand.vmem [shape: f32[10], index: 2, kind: input, shape index: {}]
  %s3 = inlined_call_operand.vmem [shape: f32[10], index: 3, kind: input, shape index: {}]
  %s4 = inlined_call_operand.<no memory space> [shape: f32[1], index: 4, kind: input, shape index: {}]
  %s5 = inlined_call_operand.hbm [shape: f32[1,128], index: 5, kind: output, shape index: {}]
  %s6 = sld [smem:[#allocation0]]
  $region42: #{tpu_custom_call.1} parent=0
    _
  %s8 = ssub.s32 1, %s6
  %s9 = scalar_select 0, %s8, %s6
  %10 = sst [smem:[#allocation2]] %s4
  $region1: #{tpu_custom_call.1} parent=0
    #allocation3 [shape = 'u8[512]{0}', space=smem, size = 0x200, scoped, tag = 'input window, operand 1, single buffered']
    #allocation4 [shape = 's32[1]{0}', space=sflag, size = 0x4, scoped, tag = 'scoped memory for tpu_custom_call.1']
    #allocation5 [shape = 's32[1]{0}', space=sflag, size = 0x4, scoped, tag = 'scoped memory for tpu_custom_call.1']
    #allocation6 [shape = 'u8[512]{0}', space=smem, size = 0x200, scoped, tag = 'input window, operand 2, single buffered']
    #allocation7 [shape = 's32[1]{0}', space=sflag, size = 0x4, scoped, tag = 'scoped memory for tpu_custom_call.1']
    #allocation8 [shape = 'u8[512]{0}', space=smem, size = 0x200, scoped, tag = 'input window, operand 3, single buffered']
    #allocation9 [shape = 'u8[512]{0}', space=vmem, size = 0x400, scoped, tag = 'output window, operand 0, single buffered']
    %11 = vsyncpa [#allocation5], 0
    %12 = vsyncpa [#allocation7], 0
    %13 = vsyncpa [#allocation4], 0
    // Predicated region
    $region2: #{tpu_custom_call.1} parent=1 // pred_check
      _
    $region3: #{tpu_custom_call.1} parent=1 // pred_check_branch
      %15 = sbr.rel (0) target = $region5
    $region4: #{tpu_custom_call.1} parent=1 // pred_region
      _
    $region5: #{tpu_custom_call.1} parent=1 // pred_fallthru
      _
    // Predicated region
    $region6: #{tpu_custom_call.1} parent=1 // pred_check
      _
    $region7: #{tpu_custom_call.1} parent=1 // pred_check_branch
      %17 = sbr.rel (0) target = $region9
    $region8: #{tpu_custom_call.1} parent=1 // pred_region
      %s19 = ssub.s32 16, 16
      %20 = vsyncadd [#allocation5], %s19
      %s22 = sshll.u32 %s1, 4
      %s23 = int_to_ptr.vmem [resolvable:$true] %s22
      %25 = dma.vmem_to_smem %s23, 16, [#allocation3], [#allocation5]
    $region9: #{tpu_custom_call.1} parent=1 // pred_fallthru
      _
    // Predicated region
    $region10: #{tpu_custom_call.1} parent=1 // pred_check
      _
    $region11: #{tpu_custom_call.1} parent=1 // pred_check_branch
      %27 = sbr.rel (0) target = $region13
    $region12: #{tpu_custom_call.1} parent=1 // pred_region
      %s29 = ssub.s32 16, 16
      %30 = vsyncadd [#allocation7], %s29
      %s32 = sshll.u32 %s2, 4
      %s33 = int_to_ptr.vmem [resolvable:$true] %s32
      %35 = dma.vmem_to_smem %s33, 16, [#allocation6], [#allocation7]
    $region13: #{tpu_custom_call.1} parent=1 // pred_fallthru
      _
    // Predicated region
    $region14: #{tpu_custom_call.1} parent=1 // pred_check
      _
    $region15: #{tpu_custom_call.1} parent=1 // pred_check_branch
      %37 = sbr.rel (0) target = $region17
    $region16: #{tpu_custom_call.1} parent=1 // pred_region
      %s39 = ssub.s32 16, 16
      %40 = vsyncadd [#allocation7], %s39
      %s42 = sshll.u32 %s3, 4
      %s43 = int_to_ptr.vmem [resolvable:$true] %s42
      %45 = dma.vmem_to_smem %s43, 16, [#allocation8], [#allocation7]
    $region17: #{tpu_custom_call.1} parent=1 // pred_fallthru
      _
    // Predicated region
    $region18: #{tpu_custom_call.1} parent=1 // pred_check
      _
    $region19: #{tpu_custom_call.1} parent=1 // pred_check_branch
      %47 = sbr.rel (0) target = $region21
    $region20: #{tpu_custom_call.1} parent=1 // pred_region
      _
    $region21: #{tpu_custom_call.1} parent=1 // pred_fallthru
      _
    // Predicated region
    $region22: #{tpu_custom_call.1} parent=1 // pred_check
      _
    $region23: #{tpu_custom_call.1} parent=1 // pred_check_branch
      %49 = sbr.rel (0) target = $region25
    $region24: #{tpu_custom_call.1} parent=1 // pred_region
      %50 = dma.done [#allocation5], 16
    $region25: #{tpu_custom_call.1} parent=1 // pred_fallthru
      _
    // Predicated region
    $region26: #{tpu_custom_call.1} parent=1 // pred_check
      _
    $region27: #{tpu_custom_call.1} parent=1 // pred_check_branch
      %52 = sbr.rel (0) target = $region29
    $region28: #{tpu_custom_call.1} parent=1 // pred_region
      %53 = dma.done [#allocation7], 16
    $region29: #{tpu_custom_call.1} parent=1 // pred_fallthru
      _
    // Predicated region
    $region30: #{tpu_custom_call.1} parent=1 // pred_check
      _
    $region31: #{tpu_custom_call.1} parent=1 // pred_check_branch
      %55 = sbr.rel (0) target = $region33
    $region32: #{tpu_custom_call.1} parent=1 // pred_region
      %56 = dma.done [#allocation7], 16
    $region33: #{tpu_custom_call.1} parent=1 // pred_fallthru
      _
    %57 = sfence
    %s58 = sld [smem:[#allocation3]]
    %s59 = sld [smem:[#allocation3 + $0x1]]
    %s60 = sld [smem:[#allocation3 + $0x2]]
    %s61 = sld [smem:[#allocation3 + $0x3]]
    %s62 = sld [smem:[#allocation3 + $0x4]]
    %s63 = sld [smem:[#allocation3 + $0x5]]
    %s64 = sld [smem:[#allocation3 + $0x6]]
    %s65 = sld [smem:[#allocation3 + $0x7]]
    %s66 = sld [smem:[#allocation3 + $0x8]]
    %s67 = sld [smem:[#allocation3 + $0x9]]
    %s68 = sld [smem:[#allocation6]]
    %s69 = sld [smem:[#allocation6 + $0x1]]
    %s70 = sld [smem:[#allocation6 + $0x2]]
    %s71 = sld [smem:[#allocation6 + $0x3]]
    %s72 = sld [smem:[#allocation6 + $0x4]]
    %s73 = sld [smem:[#allocation6 + $0x5]]
    %s74 = sld [smem:[#allocation6 + $0x6]]
    %s75 = sld [smem:[#allocation6 + $0x7]]
    %s76 = sld [smem:[#allocation6 + $0x8]]
    %s77 = sld [smem:[#allocation6 + $0x9]]
    %s78 = sld [smem:[#allocation8]]
    %s79 = sld [smem:[#allocation8 + $0x1]]
    %s80 = sld [smem:[#allocation8 + $0x2]]
    %s81 = sld [smem:[#allocation8 + $0x3]]
    %s82 = sld [smem:[#allocation8 + $0x4]]
    %s83 = sld [smem:[#allocation8 + $0x5]]
    %s84 = sld [smem:[#allocation8 + $0x6]]
    %s85 = sld [smem:[#allocation8 + $0x7]]
    %s86 = sld [smem:[#allocation8 + $0x8]]
    %s87 = sld [smem:[#allocation8 + $0x9]]
    %s88 = sld [smem:[#allocation2]]
    %v89 = vld [vmem:[%s0] sm:$0x1]
    %v90 = vstv %s58
    %v91 = vmul.f32 %v90, %v89
    %v92 = vstv %s68
    %v93 = vadd.f32 %v91, %v92
    %v94 = vtanh.pop %v93
    %v95 = vstv %s78
    %v96 = vmul.f32 %v95, %v94
    %v97 = vstv %s59
    %v98 = vmul.f32 %v97, %v89
    %v99 = vstv %s69
    %v100 = vadd.f32 %v98, %v99
    %v101 = vtanh.pop %v100
    %v102 = vstv %s79
    %v103 = vmul.f32 %v102, %v101
    %v104 = vadd.f32 %v96, %v103
    %v105 = vstv %s60
    %v106 = vmul.f32 %v105, %v89
    %v107 = vstv %s70
    %v108 = vadd.f32 %v106, %v107
    %v109 = vtanh.pop %v108
    %v110 = vstv %s80
    %v111 = vmul.f32 %v110, %v109
    %v112 = vadd.f32 %v104, %v111
    %v113 = vstv %s61
    %v114 = vmul.f32 %v113, %v89
    %v115 = vstv %s71
    %v116 = vadd.f32 %v114, %v115
    %v117 = vtanh.pop %v116
    %v118 = vstv %s81
    %v119 = vmul.f32 %v118, %v117
    %v120 = vadd.f32 %v112, %v119
    %v121 = vstv %s62
    %v122 = vmul.f32 %v121, %v89
    %v123 = vstv %s72
    %v124 = vadd.f32 %v122, %v123
    %v125 = vtanh.pop %v124
    %v126 = vstv %s82
    %v127 = vmul.f32 %v126, %v125
    %v128 = vadd.f32 %v120, %v127
    %v129 = vstv %s63
    %v130 = vmul.f32 %v129, %v89
    %v131 = vstv %s73
    %v132 = vadd.f32 %v130, %v131
    %v133 = vtanh.pop %v132
    %v134 = vstv %s83
    %v135 = vmul.f32 %v134, %v133
    %v136 = vadd.f32 %v128, %v135
    %v137 = vstv %s64
    %v138 = vmul.f32 %v137, %v89
    %v139 = vstv %s74
    %v140 = vadd.f32 %v138, %v139
    %v141 = vtanh.pop %v140
    %v142 = vstv %s84
    %v143 = vmul.f32 %v142, %v141
    %v144 = vadd.f32 %v136, %v143
    %v145 = vstv %s65
    %v146 = vmul.f32 %v145, %v89
    %v147 = vstv %s75
    %v148 = vadd.f32 %v146, %v147
    %v149 = vtanh.pop %v148
    %v150 = vstv %s85
    %v151 = vmul.f32 %v150, %v149
    %v152 = vadd.f32 %v144, %v151
    %v153 = vstv %s66
    %v154 = vmul.f32 %v153, %v89
    %v155 = vstv %s76
    %v156 = vadd.f32 %v154, %v155
    %v157 = vtanh.pop %v156
    %v158 = vstv %s86
    %v159 = vmul.f32 %v158, %v157
    %v160 = vadd.f32 %v152, %v159
    %v161 = vstv %s67
    %v162 = vmul.f32 %v161, %v89
    %v163 = vstv %s77
    %v164 = vadd.f32 %v162, %v163
    %v165 = vtanh.pop %v164
    %v166 = vstv %s87
    %v167 = vmul.f32 %v166, %v165
    %v168 = vadd.f32 %v160, %v167
    %v169 = vstv %s88
    %v170 = vadd.f32 %v168, %v169
    %171 = vst [vmem:[#allocation9] sm:$0x1] %v170
    // Predicated region
    $region34: #{tpu_custom_call.1} parent=1 // pred_check
      _
    $region35: #{tpu_custom_call.1} parent=1 // pred_check_branch
      %173 = sbr.rel (0) target = $region37
    $region36: #{tpu_custom_call.1} parent=1 // pred_region
      %s175 = ssub.s32 16, 16
      %176 = vsyncadd [#allocation4], %s175
      %s178 = sshll.u32 [#allocation9], 4
      %s179 = int_to_ptr.vmem [resolvable:$true] %s178
      %181 = dma.vmem_to_hbm [thread:$0]  %s179, 16, %s5, [#allocation4]
    $region37: #{tpu_custom_call.1} parent=1 // pred_fallthru
      _
    // Predicated region
    $region38: #{tpu_custom_call.1} parent=1 // pred_check
      _
    $region39: #{tpu_custom_call.1} parent=1 // pred_check_branch
      %183 = sbr.rel (0) target = $region41
    $region40: #{tpu_custom_call.1} parent=1 // pred_region
      %184 = dma.done [#allocation4], 16
    $region41: #{tpu_custom_call.1} parent=1 // pred_fallthru
      _
    %185 = vsyncpa [#allocation4], 1
    %186 = vsyncpa [#allocation5], 1
    %187 = vsyncpa [#allocation7], 1

</llo_original>
